<compile_context>
chip_gen: v7x
topology: tpu7x:2x2x1
jax: 0.10.0
libtpu: 0.0.40
codegen_flags: <defaults>
</compile_context>

<pallas_src>
import jax
import jax.numpy as jnp
from jax.experimental import pallas as pl
from jax.experimental.pallas import tpu as pltpu


def _round_up(x, m):
    return (x + m - 1) // m * m


def _vmem_capacity_bytes():
    try:
        cap = getattr(pltpu.get_tpu_info(), "vmem_capacity_bytes", None)
        if cap:
            return int(cap)
    except Exception:
        pass
    return 64 << 20          # conservative default (v7x per-TensorCore VMEM)


def _pick_tiles(B, S, H, vmem_cap):
    """Pick (TB, TS) so two double-buffered emb tiles fit VMEM with headroom."""
    # Sequence tile: multiple of 16 (bf16 sublane packing), large DMAs.
    TS = min(512, _round_up(S, 16))
    # Batch tile: 32 on 128 MiB parts (v5e/v6e), 16 on v7x (64 MiB per TC).
    # Keep >= 2 batch blocks so the "parallel" axis can shard across TensorCores.
    TB = 32 if vmem_cap >= (96 << 20) else 16
    b8 = _round_up(B, 8)
    while TB > 8 and (b8 % TB != 0 or b8 // TB < 2):
        TB //= 2
    # Shrink until the double-buffered emb stream leaves room for weights,
    # output, scratch and compiler-internal temporaries.
    emb_budget = max(vmem_cap - (24 << 20), 12 << 20)
    while 2 * (TB * TS * H * 2) > emb_budget and (TS > 16 or TB > 8):
        if TS > 16:
            TS = max(16, (TS // 2 + 15) // 16 * 16)
        else:
            TB //= 2
    return TB, TS


def _classifier_kernel(maxlen_ref,            # SMEM scalar prefetch: (1,) int32
                       vlen_ref,              # (TB, 1) int32        valid lengths
                       emb_ref,               # (TB, TS, H) bf16     encoder output tile
                       wp_hbm, wc_hbm,        # HBM refs: (H, H) / (H, C_pad) bf16
                       bp_ref, bc_ref,        # (1, H) / (1, C_pad) f32
                       out_ref,               # (TB, C_pad) f32      lane-dense logits
                       acc_ref,               # scratch (TB, H) f32  pooled-sum accumulator
                       wp_vmem, wc_vmem,      # scratch: single-buffered weights
                       wsem):                 # DMA semaphores (2,)
    s = pl.program_id(1)
    ns = pl.num_programs(1)
    TB, TS, H = emb_ref.shape

    @pl.when(s == 0)
    def _init():
        acc_ref[...] = jnp.zeros_like(acc_ref)
        # Single-buffered pooler/classifier weights: one async DMA per batch
        # block, fully overlapped with the sequence accumulation below.
        pltpu.make_async_copy(wp_hbm, wp_vmem, wsem.at[0]).start()
        pltpu.make_async_copy(wc_hbm, wc_vmem, wsem.at[1]).start()

    # Skip sequence tiles that lie entirely past max(valid_length) (perf only:
    # the masked matmul below is already correct without this gate).
    @pl.when(s * TS < maxlen_ref[0])
    def _accumulate():
        # (TB, TS, H) -> (TB*TS, H): layout-preserving collapse (TS % 16 == 0).
        emb2 = emb_ref[...].reshape(TB * TS, H)
        # Block-diagonal selection: sel[b, b*TS + t] = 1{t + s*TS < vlen[b]}.
        col = jax.lax.broadcasted_iota(jnp.int32, (TB, TB * TS), 1)
        row = jax.lax.broadcasted_iota(jnp.int32, (TB, TB * TS), 0)
        rel = col - row * TS                                    # in-row position t
        bound = jnp.minimum(vlen_ref[...] - s * TS, TS)         # (TB, 1)
        sel = ((rel >= 0) & (rel < bound)).astype(emb2.dtype)   # bf16 0/1
        # gen_attention_mask + masked sequence sum as ONE 2-D matmul on the
        # MXU (keeps VPU slots free; the MXU is otherwise idle during accumulation).
        acc_ref[...] += jnp.dot(sel, emb2, preferred_element_type=jnp.float32)

    @pl.when(s == ns - 1)
    def _finalize():
        pltpu.make_async_copy(wp_hbm, wp_vmem, wsem.at[0]).wait()
        pltpu.make_async_copy(wc_hbm, wc_vmem, wsem.at[1]).wait()
        # masked-mean denominator == #unmasked tokens == valid_length (clamped to S).
        denom = jnp.maximum(vlen_ref[...].astype(jnp.float32), 1.0)     # (TB, 1)
        pooled = acc_ref[...] * pl.reciprocal(denom, approx=True)       # (TB, H)
        # BERT pooler: tanh(pooled @ Wp + bp)   (bf16 operands -> f32 MXU acc)
        pooler = jnp.tanh(
            jnp.dot(pooled.astype(jnp.bfloat16), wp_vmem[...],
                    preferred_element_type=jnp.float32) + bp_ref[...])
        # self.classifier: Linear(hidden_size, num_classes)  (lane-padded to C_pad)
        out_ref[...] = (
            jnp.dot(pooler.astype(jnp.bfloat16), wc_vmem[...],
                    preferred_element_type=jnp.float32) + bc_ref[...])


def bert_classifier_forward(token_ids, valid_length, segment_ids, params):
    """BERTClassifier forward; mask-gen, pooling, pooler and classifier in one kernel."""
    tok_emb = params["tok_embedding"]        # (V, H)
    seg_emb = params["seg_embedding"]        # (2, H)
    wp, bp = params["pooler_w"], params["pooler_b"]           # (H, H), (1, H)
    wc, bc = params["classifier_w"], params["classifier_b"]   # (H, C), (1, C)

    B, S = token_ids.shape
    H = tok_emb.shape[1]
    C = wc.shape[1]

    vmem_cap = _vmem_capacity_bytes()
    TB, TS = _pick_tiles(B, S, H, vmem_cap)
    B_pad = _round_up(B, TB)
    S_pad = _round_up(S, TS)
    C_pad = _round_up(C, 128)                 # lane-dense output
    # NOTE: demo H=32 is legal because the emb block's last dim equals the full
    # array dim; production H should be a multiple of 128 (e.g. 768).

    # Pad the tiny int32 id arrays BEFORE the gather so the gather emits the
    # (B_pad, S_pad, H) bf16 tensor directly (no extra full read+write of the
    # dominant HBM stream).
    tok_p = jnp.pad(token_ids.astype(jnp.int32), ((0, B_pad - B), (0, S_pad - S)))
    seg_p = jnp.pad(segment_ids.astype(jnp.int32), ((0, B_pad - B), (0, S_pad - S)))
    emb = (jnp.take(tok_emb, tok_p, axis=0)
           + jnp.take(seg_emb, seg_p, axis=0)).astype(jnp.bfloat16)

    # valid_length clamped to S so the in-kernel mask count == min(vlen, S) exactly.
    vlen = jnp.minimum(valid_length.astype(jnp.int32), S)
    vlen_col = jnp.pad(vlen, (0, B_pad - B)).reshape(B_pad, 1)
    max_len = jnp.max(vlen, keepdims=True).astype(jnp.int32)    # (1,) scalar prefetch

    wp_bf = wp.astype(jnp.bfloat16)                                        # (H, H)
    wc_bf = jnp.pad(wc.astype(jnp.bfloat16), ((0, 0), (0, C_pad - C)))     # (H, C_pad)
    bp_f = bp.astype(jnp.float32)                                          # (1, H)
    bc_f = jnp.pad(bc.astype(jnp.float32), ((0, 0), (0, C_pad - C)))       # (1, C_pad)

    grid = (B_pad // TB, S_pad // TS)

    # VMEM budget: double-buffered emb tile + single-buffered weights + small
    # blocks/scratch + headroom for in-kernel iota/select temporaries.
    emb_tile = TB * TS * H * 2
    weights = (H * H + H * C_pad) * 2 + 2 * (H + C_pad) * 4
    small = 2 * TB * 128 * 4 + 2 * TB * C_pad * 4 + TB * H * 4
    sel_tmp = 3 * TB * (TB * TS) * 4
    est = 2 * emb_tile + weights + small + sel_tmp
    cap = max(vmem_cap - (16 << 20), 32 << 20)
    vmem_limit = int(min(max(est + (8 << 20), 32 << 20), cap))

    grid_spec = pltpu.PrefetchScalarGridSpec(
        num_scalar_prefetch=1,                 # max(valid_length) -> SMEM
        grid=grid,
        in_specs=[
            pl.BlockSpec((TB, 1), lambda b, s, ml: (b, 0)),          # valid_length column
            pl.BlockSpec((TB, TS, H), lambda b, s, ml: (b, s, 0)),   # emb tile
            pl.BlockSpec(memory_space=pl.ANY),                       # Wp (HBM, manual DMA)
            pl.BlockSpec(memory_space=pl.ANY),                       # Wc (HBM, manual DMA)
            pl.BlockSpec((1, H), lambda b, s, ml: (0, 0)),           # bp
            pl.BlockSpec((1, C_pad), lambda b, s, ml: (0, 0)),       # bc
        ],
        out_specs=pl.BlockSpec((TB, C_pad), lambda b, s, ml: (b, 0)),
        scratch_shapes=[
            pltpu.VMEM((TB, H), jnp.float32),          # pooled-sum accumulator
            pltpu.VMEM((H, H), jnp.bfloat16),          # Wp (single-buffered)
            pltpu.VMEM((H, C_pad), jnp.bfloat16),      # Wc (single-buffered)
            pltpu.SemaphoreType.DMA((2,)),
        ],
    )

    logits_pad = pl.pallas_call(
        _classifier_kernel,
        out_shape=jax.ShapeDtypeStruct((B_pad, C_pad), jnp.float32),
        grid_spec=grid_spec,
        compiler_params=pltpu.CompilerParams(
            dimension_semantics=("parallel", "arbitrary"),
            vmem_limit_bytes=vmem_limit),
    )(max_len, vlen_col, emb, wp_bf, wc_bf, bp_f, bc_f)

    return logits_pad[:B, :C]


def make_params(key, vocab_size, hidden_size, num_classes):
    ks = jax.random.split(key, 6)
    scale = 0.02
    return {
        "tok_embedding": scale * jax.random.normal(ks[0], (vocab_size, hidden_size), jnp.float32),
        "seg_embedding": scale * jax.random.normal(ks[1], (2, hidden_size), jnp.float32),
        "pooler_w": scale * jax.random.normal(ks[2], (hidden_size, hidden_size), jnp.float32),
        "pooler_b": scale * jax.random.normal(ks[3], (1, hidden_size), jnp.float32),
        "classifier_w": scale * jax.random.normal(ks[4], (hidden_size, num_classes), jnp.float32),
        "classifier_b": scale * jax.random.normal(ks[5], (1, num_classes), jnp.float32),
    }


def _reference(token_ids, valid_length, segment_ids, params):
    """Pure-JAX reference (same bf16 emb/weight hand-off as the kernel)."""
    emb = (jnp.take(params["tok_embedding"], token_ids, axis=0)
           + jnp.take(params["seg_embedding"], segment_ids, axis=0))
    emb = emb.astype(jnp.bfloat16).astype(jnp.float32)
    B, S, H = emb.shape
    mask = (jnp.arange(S)[None, :] < valid_length[:, None]).astype(jnp.float32)
    pooled = (emb * mask[:, :, None]).sum(1) / jnp.maximum(mask.sum(1, keepdims=True), 1.0)
    wp = params["pooler_w"].astype(jnp.bfloat16).astype(jnp.float32)
    wc = params["classifier_w"].astype(jnp.bfloat16).astype(jnp.float32)
    pooler = jnp.tanh(pooled @ wp + params["pooler_b"])
    return pooler @ wc + params["classifier_b"]


if __name__ == "__main__":
    B, S, H, C, V = 2, 8, 32, 7, 100

    key = jax.random.PRNGKey(0)
    k_tok, k_seg, k_len, k_params = jax.random.split(key, 4)

    token_ids = jax.random.randint(k_tok, (B, S), 0, V, dtype=jnp.int32)
    segment_ids = jax.random.randint(k_seg, (B, S), 0, 2, dtype=jnp.int32)
    valid_length = jax.random.randint(k_len, (B,), 1, S + 1, dtype=jnp.int32)

    params = make_params(k_params, V, H, C)

    logits = bert_classifier_forward(token_ids, valid_length, segment_ids, params)
    logits = jax.block_until_ready(logits)

    ref = _reference(token_ids, valid_length, segment_ids, params)
    assert logits.shape == (B, C)
    max_diff = float(jnp.max(jnp.abs(logits - ref)))
    assert jnp.allclose(logits, ref, atol=5e-3, rtol=2e-2), f"max abs diff {max_diff}"

    print("KERNEL_OK")
</pallas_src>

<mosaic_0001>
module attributes {stable_mosaic.version = 11 : i64} {
  func.func @_classifier_kernel(%arg0: i32, %arg1: i32, %arg2: memref<1xi32, #tpu.memory_space<smem>>, %arg3: memref<8x1xi32, #tpu.memory_space<vmem>>, %arg4: memref<8x16x32xbf16, #tpu.memory_space<vmem>>, %arg5: memref<32x32xbf16, #tpu.memory_space<any>>, %arg6: memref<32x128xbf16, #tpu.memory_space<any>>, %arg7: memref<1x32xf32, #tpu.memory_space<vmem>>, %arg8: memref<1x128xf32, #tpu.memory_space<vmem>>, %arg9: memref<8x128xf32, #tpu.memory_space<vmem>>, %arg10: memref<8x32xf32, #tpu.memory_space<vmem>>, %arg11: memref<32x32xbf16, #tpu.memory_space<vmem>>, %arg12: memref<32x128xbf16, #tpu.memory_space<vmem>>, %arg13: memref<2x!tpu.dma_semaphore, #tpu.memory_space<semaphore_mem>>) attributes {dimension_semantics = [#tpu.dimension_semantics<parallel>, #tpu.dimension_semantics<arbitrary>], iteration_bounds = array<i64: 1, 1>, scalar_prefetch = 1 : i64, scratch_operands = 4 : i64, tpu.core_type = #tpu.core_type<tc>, window_params = [{transform_indices = @transform_0, window_bounds = array<i64: 8, 1>}, {transform_indices = @transform_1, window_bounds = array<i64: 8, 16, 32>}, {}, {}, {pipeline_mode = #tpu.pipeline_mode<synchronous>, transform_indices = @transform_4, window_bounds = array<i64: 1, 32>}, {pipeline_mode = #tpu.pipeline_mode<synchronous>, transform_indices = @transform_5, window_bounds = array<i64: 1, 128>}, {transform_indices = @transform_6, window_bounds = array<i64: 8, 128>}]} {
    %c0_i32 = arith.constant 0 : i32
    %0 = arith.cmpi eq, %arg1, %c0_i32 : i32
    %1 = arith.extui %0 : i1 to i32
    %c0_i32_0 = arith.constant 0 : i32
    %2 = arith.cmpi ne, %1, %c0_i32_0 : i32
    scf.if %2 {
      %cst = arith.constant 0.000000e+00 : f32
      %11 = vector.broadcast %cst : f32 to vector<8x32xf32>
      %c0_4 = arith.constant 0 : index
      %c0_5 = arith.constant 0 : index
      %12 = vector.load %arg10[%c0_4, %c0_5] : memref<8x32xf32, #tpu.memory_space<vmem>>, vector<8x32xf32>
      tpu.vector_store %arg10[%c0_4, %c0_5], %11 {strides = array<i32>} : memref<8x32xf32, #tpu.memory_space<vmem>>, vector<8x32xf32>,
      %c0_i32_6 = arith.constant 0 : i32
      %13 = tpu.memref_slice %arg13[%c0_i32_6] : memref<2x!tpu.dma_semaphore, #tpu.memory_space<semaphore_mem>> -> memref<1x!tpu.dma_semaphore, #tpu.memory_space<semaphore_mem>>
      %14 = tpu.memref_squeeze %13 : memref<1x!tpu.dma_semaphore, #tpu.memory_space<semaphore_mem>> -> memref<!tpu.dma_semaphore, #tpu.memory_space<semaphore_mem>>
      tpu.enqueue_dma source(%arg5 : memref<32x32xbf16, #tpu.memory_space<any>>) target(%arg11 : memref<32x32xbf16, #tpu.memory_space<vmem>>) target_semaphore(%14 : memref<!tpu.dma_semaphore, #tpu.memory_space<semaphore_mem>>)
      %c1_i32 = arith.constant 1 : i32
      %15 = tpu.memref_slice %arg13[%c1_i32] : memref<2x!tpu.dma_semaphore, #tpu.memory_space<semaphore_mem>> -> memref<1x!tpu.dma_semaphore, #tpu.memory_space<semaphore_mem>>
      %16 = tpu.memref_squeeze %15 : memref<1x!tpu.dma_semaphore, #tpu.memory_space<semaphore_mem>> -> memref<!tpu.dma_semaphore, #tpu.memory_space<semaphore_mem>>
      tpu.enqueue_dma source(%arg6 : memref<32x128xbf16, #tpu.memory_space<any>>) target(%arg12 : memref<32x128xbf16, #tpu.memory_space<vmem>>) target_semaphore(%16 : memref<!tpu.dma_semaphore, #tpu.memory_space<semaphore_mem>>)
    } else {
    }
    %c16_i32 = arith.constant 16 : i32
    %3 = arith.muli %arg1, %c16_i32 : i32
    %c0 = arith.constant 0 : index
    %4 = memref.load %arg2[%c0] : memref<1xi32, #tpu.memory_space<smem>>
    %5 = arith.cmpi slt, %3, %4 : i32
    %6 = arith.extui %5 : i1 to i32
    %c0_i32_1 = arith.constant 0 : i32
    %7 = arith.cmpi ne, %6, %c0_i32_1 : i32
    scf.if %7 {
      %c0_4 = arith.constant 0 : index
      %c0_5 = arith.constant 0 : index
      %c0_6 = arith.constant 0 : index
      %11 = vector.load %arg4[%c0_4, %c0_5, %c0_6] : memref<8x16x32xbf16, #tpu.memory_space<vmem>>, vector<8x16x32xbf16>
      %12 = vector.shape_cast %11 : vector<8x16x32xbf16> to vector<128x32xbf16>
      %13 = tpu.iota {dimensions = array<i32: 1>} : vector<8x128xi32>
      %14 = tpu.iota {dimensions = array<i32: 0>} : vector<8x128xi32>
      %c16_i32_7 = arith.constant 16 : i32
      %15 = vector.broadcast %c16_i32_7 : i32 to vector<8x128xi32>
      %16 = arith.muli %14, %15 : vector<8x128xi32>
      %17 = arith.subi %13, %16 : vector<8x128xi32>
      %c0_8 = arith.constant 0 : index
      %c0_9 = arith.constant 0 : index
      %18 = vector.load %arg3[%c0_8, %c0_9] : memref<8x1xi32, #tpu.memory_space<vmem>>, vector<8x1xi32>
      %c16_i32_10 = arith.constant 16 : i32
      %19 = arith.muli %arg1, %c16_i32_10 : i32
      %20 = vector.broadcast %19 : i32 to vector<8x1xi32>
      %21 = arith.subi %18, %20 : vector<8x1xi32>
      %c16_i32_11 = arith.constant 16 : i32
      %22 = vector.broadcast %c16_i32_11 : i32 to vector<8x1xi32>
      %23 = arith.minsi %21, %22 : vector<8x1xi32>
      %c0_i32_12 = arith.constant 0 : i32
      %24 = vector.broadcast %c0_i32_12 : i32 to vector<8x128xi32>
      %25 = arith.cmpi sge, %17, %24 : vector<8x128xi32>
      %26 = vector.broadcast %23 : vector<8x1xi32> to vector<8x128xi32>
      %27 = arith.cmpi slt, %17, %26 : vector<8x128xi32>
      %28 = arith.andi %25, %27 : vector<8x128xi1>
      %29 = arith.extui %28 : vector<8x128xi1> to vector<8x128xi32>
      %30 = arith.sitofp %29 : vector<8x128xi32> to vector<8x128xf32>
      %31 = arith.truncf %30 : vector<8x128xf32> to vector<8x128xbf16>
      %c0_13 = arith.constant 0 : index
      %c0_14 = arith.constant 0 : index
      %32 = vector.load %arg10[%c0_13, %c0_14] : memref<8x32xf32, #tpu.memory_space<vmem>>, vector<8x32xf32>
      %cst = arith.constant dense<0.000000e+00> : vector<8x32xf32>
      %33 = tpu.matmul %31, %12, %cst {dimension_numbers = #tpu.dot_dimension_numbers<[1], [0], [0], [1], [0, 0, 1, 1], [], []>} : vector<8x128xbf16>, vector<128x32xbf16>, vector<8x32xf32> -> vector<8x32xf32>
      %34 = arith.addf %32, %33 : vector<8x32xf32>
      %c0_15 = arith.constant 0 : index
      %c0_16 = arith.constant 0 : index
      %35 = vector.load %arg10[%c0_15, %c0_16] : memref<8x32xf32, #tpu.memory_space<vmem>>, vector<8x32xf32>
      tpu.vector_store %arg10[%c0_15, %c0_16], %34 {strides = array<i32>} : memref<8x32xf32, #tpu.memory_space<vmem>>, vector<8x32xf32>,
    } else {
    }
    %c0_i32_2 = arith.constant 0 : i32
    %8 = arith.cmpi eq, %arg1, %c0_i32_2 : i32
    %9 = arith.extui %8 : i1 to i32
    %c0_i32_3 = arith.constant 0 : i32
    %10 = arith.cmpi ne, %9, %c0_i32_3 : i32
    scf.if %10 {
      %c0_i32_4 = arith.constant 0 : i32
      %11 = tpu.memref_slice %arg13[%c0_i32_4] : memref<2x!tpu.dma_semaphore, #tpu.memory_space<semaphore_mem>> -> memref<1x!tpu.dma_semaphore, #tpu.memory_space<semaphore_mem>>
      %12 = tpu.memref_squeeze %11 : memref<1x!tpu.dma_semaphore, #tpu.memory_space<semaphore_mem>> -> memref<!tpu.dma_semaphore, #tpu.memory_space<semaphore_mem>>
      tpu.wait_dma2 semaphore(%12 : memref<!tpu.dma_semaphore, #tpu.memory_space<semaphore_mem>>) src(%arg5 : memref<32x32xbf16, #tpu.memory_space<any>>) dst(%arg11 : memref<32x32xbf16, #tpu.memory_space<vmem>>)
      %c1_i32 = arith.constant 1 : i32
      %13 = tpu.memref_slice %arg13[%c1_i32] : memref<2x!tpu.dma_semaphore, #tpu.memory_space<semaphore_mem>> -> memref<1x!tpu.dma_semaphore, #tpu.memory_space<semaphore_mem>>
      %14 = tpu.memref_squeeze %13 : memref<1x!tpu.dma_semaphore, #tpu.memory_space<semaphore_mem>> -> memref<!tpu.dma_semaphore, #tpu.memory_space<semaphore_mem>>
      tpu.wait_dma2 semaphore(%14 : memref<!tpu.dma_semaphore, #tpu.memory_space<semaphore_mem>>) src(%arg6 : memref<32x128xbf16, #tpu.memory_space<any>>) dst(%arg12 : memref<32x128xbf16, #tpu.memory_space<vmem>>)
      %c0_5 = arith.constant 0 : index
      %c0_6 = arith.constant 0 : index
      %15 = vector.load %arg3[%c0_5, %c0_6] : memref<8x1xi32, #tpu.memory_space<vmem>>, vector<8x1xi32>
      %16 = arith.sitofp %15 : vector<8x1xi32> to vector<8x1xf32>
      %cst = arith.constant 1.000000e+00 : f32
      %17 = vector.broadcast %cst : f32 to vector<8x1xf32>
      %18 = arith.maximumf %16, %17 : vector<8x1xf32>
      %c0_7 = arith.constant 0 : index
      %c0_8 = arith.constant 0 : index
      %19 = vector.load %arg10[%c0_7, %c0_8] : memref<8x32xf32, #tpu.memory_space<vmem>>, vector<8x32xf32>
      %20 = tpu.reciprocal %18 {approx = true} : vector<8x1xf32> -> vector<8x1xf32>
      %21 = vector.broadcast %20 : vector<8x1xf32> to vector<8x32xf32>
      %22 = arith.mulf %19, %21 : vector<8x32xf32>
      %23 = arith.truncf %22 : vector<8x32xf32> to vector<8x32xbf16>
      %c0_9 = arith.constant 0 : index
      %c0_10 = arith.constant 0 : index
      %24 = vector.load %arg11[%c0_9, %c0_10] : memref<32x32xbf16, #tpu.memory_space<vmem>>, vector<32x32xbf16>
      %cst_11 = arith.constant dense<0.000000e+00> : vector<8x32xf32>
      %25 = tpu.matmul %23, %24, %cst_11 {dimension_numbers = #tpu.dot_dimension_numbers<[1], [0], [0], [1], [0, 0, 1, 1], [], []>} : vector<8x32xbf16>, vector<32x32xbf16>, vector<8x32xf32> -> vector<8x32xf32>
      %c0_12 = arith.constant 0 : index
      %c0_13 = arith.constant 0 : index
      %26 = vector.load %arg7[%c0_12, %c0_13] : memref<1x32xf32, #tpu.memory_space<vmem>>, vector<1x32xf32>
      %27 = vector.broadcast %26 : vector<1x32xf32> to vector<8x32xf32>
      %28 = arith.addf %25, %27 : vector<8x32xf32>
      %29 = math.tanh %28 : vector<8x32xf32>
      %30 = arith.truncf %29 : vector<8x32xf32> to vector<8x32xbf16>
      %c0_14 = arith.constant 0 : index
      %c0_15 = arith.constant 0 : index
      %31 = vector.load %arg12[%c0_14, %c0_15] : memref<32x128xbf16, #tpu.memory_space<vmem>>, vector<32x128xbf16>
      %cst_16 = arith.constant dense<0.000000e+00> : vector<8x128xf32>
      %32 = tpu.matmul %30, %31, %cst_16 {dimension_numbers = #tpu.dot_dimension_numbers<[1], [0], [0], [1], [0, 0, 1, 1], [], []>} : vector<8x32xbf16>, vector<32x128xbf16>, vector<8x128xf32> -> vector<8x128xf32>
      %c0_17 = arith.constant 0 : index
      %c0_18 = arith.constant 0 : index
      %33 = vector.load %arg8[%c0_17, %c0_18] : memref<1x128xf32, #tpu.memory_space<vmem>>, vector<1x128xf32>
      %34 = vector.broadcast %33 : vector<1x128xf32> to vector<8x128xf32>
      %35 = arith.addf %32, %34 : vector<8x128xf32>
      %c0_19 = arith.constant 0 : index
      %c0_20 = arith.constant 0 : index
      %36 = vector.load %arg9[%c0_19, %c0_20] : memref<8x128xf32, #tpu.memory_space<vmem>>, vector<8x128xf32>
      tpu.vector_store %arg9[%c0_19, %c0_20], %35 {strides = array<i32>} : memref<8x128xf32, #tpu.memory_space<vmem>>, vector<8x128xf32>,
    } else {
    }
    return
  }
  func.func @transform_0(%arg0: i32, %arg1: i32, %arg2: memref<1xi32, #tpu.memory_space<smem>>) -> (i32, i32) {
    %c0_i32 = arith.constant 0 : i32
    %c0_i32_0 = arith.constant 0 : i32
    return %arg0, %c0_i32 : i32, i32
  }
  func.func @transform_1(%arg0: i32, %arg1: i32, %arg2: memref<1xi32, #tpu.memory_space<smem>>) -> (i32, i32, i32) {
    %c0_i32 = arith.constant 0 : i32
    %c0_i32_0 = arith.constant 0 : i32
    return %arg0, %arg1, %c0_i32 : i32, i32, i32
  }
  func.func @transform_4(%arg0: i32, %arg1: i32, %arg2: memref<1xi32, #tpu.memory_space<smem>>) -> (i32, i32) {
    %c0_i32 = arith.constant 0 : i32
    %c0_i32_0 = arith.constant 0 : i32
    %c0_i32_1 = arith.constant 0 : i32
    return %c0_i32, %c0_i32_0 : i32, i32
  }
  func.func @transform_5(%arg0: i32, %arg1: i32, %arg2: memref<1xi32, #tpu.memory_space<smem>>) -> (i32, i32) {
    %c0_i32 = arith.constant 0 : i32
    %c0_i32_0 = arith.constant 0 : i32
    %c0_i32_1 = arith.constant 0 : i32
    return %c0_i32, %c0_i32_0 : i32, i32
  }
  func.func @transform_6(%arg0: i32, %arg1: i32, %arg2: memref<1xi32, #tpu.memory_space<smem>>) -> (i32, i32) {
    %c0_i32 = arith.constant 0 : i32
    %c0_i32_0 = arith.constant 0 : i32
    return %arg0, %c0_i32 : i32, i32
  }
}

</mosaic_0001>

<llo_original>
// kernel: tpu_custom_call.1
$region0: #{tpu_custom_call.1}
  #allocation0 [shape = 'u32[]', space=smem, size = 0x4, offset = 0x4, fixed_abs, tag = 'smem constant byte address 0x4 - core index']
  #allocation1 [shape = 'u32[144,128]{1,0:T(1,128)}', space=vmem, size = 0x12000, scoped, tag = 'internal scratch']
  #allocation2 [shape = 'f32[8,32]{1,0:T(8,128)}', space=vmem, size = 0x1000, scoped, tag = 'scratch operand']
  #allocation3 [shape = 'bf16[32,32]{1,0:T(16,128)(2,1)}', space=vmem, size = 0x2000, scoped, tag = 'scratch operand']
  #allocation4 [shape = 'bf16[32,128]{1,0:T(16,128)(2,1)}', space=vmem, size = 0x2000, scoped, tag = 'scratch operand']
  #allocation5 [shape = 's32[2]{0}', space=sflag, size = 0x8, scoped, tag = 'scratch operand']
  #allocation6 [shape = 's32[1]{0}', space=sflag, size = 0x4, scoped, tag = 'scoped memory for tpu_custom_call.1']
  #allocation7 [shape = 's32[1]{0:T(128)S(6)}', space=smem, size = 0x200, scoped, tag = 'prefetched SMEM operand 0']
  #allocation12 [shape = 's32[]', space=sflag, size = 0x4, offset = 0, fixed_abs, tag = 'sflag constant byte address 0x0 - dummy sync flag']
  #allocation13 [shape = 's32[]', space=sflag, size = 0x4, offset = 0, fixed_abs, tag = 'sflag constant byte address 0x0 - dummy sync flag']
  #allocation14 [shape = 's32[]', space=sflag, size = 0x4, offset = 0, fixed_abs, tag = 'sflag constant byte address 0x0 - dummy sync flag']
  #allocation15 [shape = 'u32[]', space=smem, size = 0x4, offset = 0x44, fixed_abs, tag = 'smem constant byte address 0x44 - assertion arg 0']
  #allocation16 [shape = 'u32[]', space=smem, size = 0x4, offset = 0x48, fixed_abs, tag = 'smem constant byte address 0x48 - assertion arg 1']
  %s0 = inlined_call_operand.<no memory space> [shape: s32[1], index: 0, kind: input, shape index: {}]
  %s1 = inlined_call_operand.vmem [shape: s32[8,1], index: 1, kind: input, shape index: {}]
  %s2 = inlined_call_operand.hbm [shape: bf16[8,16,32], index: 2, kind: input, shape index: {}]
  %s3 = inlined_call_operand.vmem [shape: bf16[32,32], index: 3, kind: input, shape index: {}]
  %s4 = inlined_call_operand.hbm [shape: bf16[32,128], index: 4, kind: input, shape index: {}]
  %s5 = inlined_call_operand.vmem [shape: f32[1,32], index: 5, kind: input, shape index: {}]
  %s6 = inlined_call_operand.vmem [shape: f32[1,128], index: 6, kind: input, shape index: {}]
  %s7 = inlined_call_operand.hbm [shape: f32[8,128], index: 7, kind: output, shape index: {}]
  %s8 = sld [smem:[#allocation0]]
  $region80: #{tpu_custom_call.1} parent=0
    _
  %s10 = ssub.s32 1, %s8
  %s11 = scalar_select 0, %s10, %s8
  %12 = sst [smem:[#allocation7]] %s0
  $region1: #{tpu_custom_call.1} parent=0
    #allocation8 [shape = 'u8[32768]{0}', space=vmem, size = 0x8000, scoped, tag = 'input window, operand 2, single buffered']
    #allocation9 [shape = 's32[1]{0}', space=sflag, size = 0x4, scoped, tag = 'scoped memory for tpu_custom_call.1']
    #allocation10 [shape = 's32[1]{0}', space=sflag, size = 0x4, scoped, tag = 'scoped memory for tpu_custom_call.1']
    #allocation11 [shape = 'u8[4096]{0}', space=vmem, size = 0x1000, scoped, tag = 'output window, operand 0, single buffered']
    %13 = vsyncpa [#allocation9], 0
    %14 = vsyncpa [#allocation10], 0
    // Predicated region
    $region2: #{tpu_custom_call.1} parent=1 // pred_check
      _
    $region3: #{tpu_custom_call.1} parent=1 // pred_check_branch
      %16 = sbr.rel (0) target = $region5
    $region4: #{tpu_custom_call.1} parent=1 // pred_region
      _
    $region5: #{tpu_custom_call.1} parent=1 // pred_fallthru
      _
    // Predicated region
    $region6: #{tpu_custom_call.1} parent=1 // pred_check
      _
    $region7: #{tpu_custom_call.1} parent=1 // pred_check_branch
      %18 = sbr.rel (0) target = $region9
    $region8: #{tpu_custom_call.1} parent=1 // pred_region
      %s20 = ssub.s32 1024, 1024
      %21 = vsyncadd [#allocation9], %s20
      %s22 = sshll.u32 [#allocation8], 4
      %s23 = int_to_ptr.vmem [resolvable:$true] %s22
      %28 = dma.hbm_to_vmem [thread:$0]  %s2, 1024, %s23, [#allocation9], 64, 64, 4
    $region9: #{tpu_custom_call.1} parent=1 // pred_fallthru
      _
    // Predicated region
    $region10: #{tpu_custom_call.1} parent=1 // pred_check
      _
    $region11: #{tpu_custom_call.1} parent=1 // pred_check_branch
      %30 = sbr.rel (0) target = $region13
    $region12: #{tpu_custom_call.1} parent=1 // pred_region
      _
    $region13: #{tpu_custom_call.1} parent=1 // pred_fallthru
      _
    // Predicated region
    $region14: #{tpu_custom_call.1} parent=1 // pred_check
      _
    $region15: #{tpu_custom_call.1} parent=1 // pred_check_branch
      %32 = sbr.rel (0) target = $region17
    $region16: #{tpu_custom_call.1} parent=1 // pred_region
      _
    $region17: #{tpu_custom_call.1} parent=1 // pred_fallthru
      _
    // Predicated region
    $region18: #{tpu_custom_call.1} parent=1 // pred_check
      _
    $region19: #{tpu_custom_call.1} parent=1 // pred_check_branch
      %34 = sbr.rel (0) target = $region21
    $region20: #{tpu_custom_call.1} parent=1 // pred_region
      %35 = dma.done [#allocation9], 1024
    $region21: #{tpu_custom_call.1} parent=1 // pred_fallthru
      _
    %p37 = scmp.eq.s32.totalorder 0, 0
    // Predicated region
    $region22: #{tpu_custom_call.1} parent=1 // pred_check
      %p38 = pneg %p37
    $region23: #{tpu_custom_call.1} parent=1 // pred_check_branch
      %40 = sbr.rel (%p38) target = $region25
    $region24: #{tpu_custom_call.1} parent=1 // pred_region
      %vm41 = vcmask 261120
      %42 = vst.msk [vmem:[#allocation2] sm:$0xff] %vm41, 0.0
      %p44 = scmp.lt.u32.totalorder 16, 8
      %p45 = pneg %p44
      // Predicated region
      $region26: #{tpu_custom_call.1} parent=24 // pred_check
        _
      $region27: #{tpu_custom_call.1} parent=24 // pred_check_branch
        %47 = sbr.rel (%p44) target = $region29
      $region28: #{tpu_custom_call.1} parent=24 // pred_region
        %s62 = sand.u32 16, 7
        %p63 = scmp.eq.s32.totalorder %s62, 0
        // Predicated region
        $region41: #{tpu_custom_call.1} parent=28 // pred_check
          %p64 = pneg %p63
        $region42: #{tpu_custom_call.1} parent=28 // pred_check_branch
          %66 = sbr.rel (%p64) target = $region44
        $region43: #{tpu_custom_call.1} parent=28 // pred_region
          loop: start=0, step=1, limit=1
          $region45: #{tpu_custom_call.1} parent=43 // loop_pre_header
            _
          $region46: #{tpu_custom_call.1} parent=43 // loop_header
            %s68 = sphi 0, %s72
            %p69 = scmp.ge.s32.totalorder %s68, 1
            %s73 = sphi %s3, %s3
            %s74 = sphi [#allocation3], [#allocation3]
          $region47: #{tpu_custom_call.1} parent=43 // loop_header_branch
            %71 = sbr.rel (%p69) target = $region51
          $region48: #{tpu_custom_call.1} parent=43 // loop_body
            %v75 = vld [vmem:[%s73] sm:$0xff]
            %76 = vst [vmem:[%s74] sm:$0xff] %v75
            %v77 = vld [vmem:[%s73 + $0x8] sm:$0xff]
            %78 = vst [vmem:[%s74 + $0x8] sm:$0xff] %v77
          $region49: #{tpu_custom_call.1} parent=43 // loop_footer
            %s72 = sadd.s32 1, %s68
          $region50: #{tpu_custom_call.1} parent=43 // loop_footer_branch
            %67 = sbr.rel target = $region46
          $region51: #{tpu_custom_call.1} parent=43 // loop_exit
            _
        $region44: #{tpu_custom_call.1} parent=28 // pred_fallthru
          _
        %p79 = pneg %p63
        // Predicated region
        $region52: #{tpu_custom_call.1} parent=28 // pred_check
          _
        $region53: #{tpu_custom_call.1} parent=28 // pred_check_branch
          %81 = sbr.rel (%p63) target = $region55
        $region54: #{tpu_custom_call.1} parent=28 // pred_region
          %s82 = sand.u32 16, 7
        $region55: #{tpu_custom_call.1} parent=28 // pred_fallthru
          _
      $region29: #{tpu_custom_call.1} parent=24 // pred_fallthru
        _
      // Predicated region
      $region30: #{tpu_custom_call.1} parent=24 // pred_check
        %p48 = pneg %p44
      $region31: #{tpu_custom_call.1} parent=24 // pred_check_branch
        %50 = sbr.rel (%p48) target = $region33
      $region32: #{tpu_custom_call.1} parent=24 // pred_region
        %s51 = sshllo.u32 0, 16
        loop: start=0, step=1, limit=1
        $region34: #{tpu_custom_call.1} parent=32 // loop_pre_header
          _
        $region35: #{tpu_custom_call.1} parent=32 // loop_header
          %s53 = sphi 0, %s57
          %p54 = scmp.ge.s32.totalorder %s53, 1
          %s58 = sphi %s3, %s3
          %s59 = sphi [#allocation3], [#allocation3]
        $region36: #{tpu_custom_call.1} parent=32 // loop_header_branch
          %56 = sbr.rel (%p54) target = $region40
        $region37: #{tpu_custom_call.1} parent=32 // loop_body
          %v60 = vld [vmem:[%s58] sm:%s51]
          %61 = vst [vmem:[%s59] sm:%s51] %v60
        $region38: #{tpu_custom_call.1} parent=32 // loop_footer
          %s57 = sadd.s32 1, %s53
        $region39: #{tpu_custom_call.1} parent=32 // loop_footer_branch
          %52 = sbr.rel target = $region35
        $region40: #{tpu_custom_call.1} parent=32 // loop_exit
          _
      $region33: #{tpu_custom_call.1} parent=24 // pred_fallthru
        _
      // Predicated region
      $region56: #{tpu_custom_call.1} parent=24 // pred_check
        _
      $region57: #{tpu_custom_call.1} parent=24 // pred_check_branch
        %85 = sbr.rel (0) target = $region59
      $region58: #{tpu_custom_call.1} parent=24 // pred_region
        %86 = vsyncadd [#allocation5], 256
      $region59: #{tpu_custom_call.1} parent=24 // pred_fallthru
        _
      %s87 = scalar_lea.sflag [#allocation5], 1
      // Predicated region
      $region60: #{tpu_custom_call.1} parent=24 // pred_check
        _
      $region61: #{tpu_custom_call.1} parent=24 // pred_check_branch
        %89 = sbr.rel target = $region63
      $region62: #{tpu_custom_call.1} parent=24 // pred_region
        %90 = sst [smem:[#allocation15]] [#allocation14]
        %91 = sst [smem:[#allocation16]] [#allocation13]
      $region63: #{tpu_custom_call.1} parent=24 // pred_fallthru
        _
      %93 = shalt.err (0)
      %s95 = sshll.u32 [#allocation4], 4
      %s96 = int_to_ptr.vmem [resolvable:$true] %s95
      %98 = dma.hbm_to_vmem [thread:$0]  %s4, 256, %s96, %s87
    $region25: #{tpu_custom_call.1} parent=1 // pred_fallthru
      _
    %s99 = smul.u32 0, 16
    %s100 = sld [smem:[#allocation7]]
    %p101 = scmp.lt.s32.totalorder %s99, %s100
    // Predicated region
    $region64: #{tpu_custom_call.1} parent=1 // pred_check
      %p102 = pneg %p101
    $region65: #{tpu_custom_call.1} parent=1 // pred_check_branch
      %104 = sbr.rel (%p102) target = $region67
    $region66: #{tpu_custom_call.1} parent=1 // pred_region
      %v105 = vld [vmem:[#allocation8] sm:$0xf]
      %v106 = vld [vmem:[#allocation8 + $0x4] sm:$0xf]
      %v107 = vld [vmem:[#allocation8 + $0x8] sm:$0xf]
      %v108 = vld [vmem:[#allocation8 + $0xc] sm:$0xf]
      %v109 = vld [vmem:[#allocation8 + $0x10] sm:$0xf]
      %v110 = vld [vmem:[#allocation8 + $0x14] sm:$0xf]
      %v111 = vld [vmem:[#allocation8 + $0x18] sm:$0xf]
      %v112 = vld [vmem:[#allocation8 + $0x1c] sm:$0xf]
      %v113 = vld [vmem:[#allocation8 + $0x20] sm:$0xf]
      %v114 = vld [vmem:[#allocation8 + $0x24] sm:$0xf]
      %v115 = vld [vmem:[#allocation8 + $0x28] sm:$0xf]
      %v116 = vld [vmem:[#allocation8 + $0x2c] sm:$0xf]
      %v117 = vld [vmem:[#allocation8 + $0x30] sm:$0xf]
      %v118 = vld [vmem:[#allocation8 + $0x34] sm:$0xf]
      %v119 = vld [vmem:[#allocation8 + $0x38] sm:$0xf]
      %v120 = vld [vmem:[#allocation8 + $0x3c] sm:$0xf]
      %v121 = vlaneseq
      %v122 = vand.u32 %v121, 127
      %v123 = vlaneseq
      %v124 = vshrl.u32 %v123, 7
      %v125 = vmul.u32 %v124, 16
      %v126 = vsub.s32 %v122, %v125
      %v127 = vld [vmem:[%s1] sm:$0xff]
      %v128 = vstv %s99
      %v129 = vsub.s32 %v127, %v128
      %vm130 = vcmp.lt.s32.totalorder %v129, 16
      %v131 = vsel %vm130, %v129, 16
      %vm132 = vcmp.ge.s32.totalorder %v126, 0
      %133 = vset.pattern.permute.xlu0 0
      %134 = vperm.xlu0 %133, %v131
      %v135 = vpop.permute.xlu0 %134
      %vm136 = vcmp.lt.s32.totalorder %v126, %v135
      %vm137 = vmand %vm132, %vm136
      %v138 = vsel %vm137, 1, 0
      %v139 = vcvt.s32.f32 %v138
      %v140 = vpack.c.bf16 %v139, %v139
      %v141 = vld [vmem:[#allocation2] sm:$0xff]
      %v158 = vunpack.c.l.b16 %v105
      %v159 = vunpack.c.l.b16 %v106
      %v160 = vunpack.c.l.b16 %v107
      %v161 = vunpack.c.l.b16 %v108
      %v162 = vunpack.c.l.b16 %v109
      %v163 = vunpack.c.l.b16 %v110
      %v164 = vunpack.c.l.b16 %v111
      %v165 = vunpack.c.l.b16 %v112
      %v166 = vunpack.c.l.b16 %v113
      %v167 = vunpack.c.l.b16 %v114
      %v168 = vunpack.c.l.b16 %v115
      %v169 = vunpack.c.l.b16 %v116
      %v170 = vunpack.c.l.b16 %v117
      %v171 = vunpack.c.l.b16 %v118
      %v172 = vunpack.c.l.b16 %v119
      %v173 = vunpack.c.l.b16 %v120
      %v174 = vpack.c.b16 %v159, %v158
      %v175 = vpack.c.b16 %v161, %v160
      %v176 = vpack.c.b16 %v163, %v162
      %v177 = vpack.c.b16 %v165, %v164
      %v178 = vpack.c.b16 %v167, %v166
      %v179 = vpack.c.b16 %v169, %v168
      %v180 = vpack.c.b16 %v171, %v170
      %v181 = vpack.c.b16 %v173, %v172
      %190 = vmatprep.subr.bf16.mxu0 0
      %191 = vmatpush1.bf16.msra.mxu0 %v174
      %192 = vmatprep.subr.bf16.mxu0 0
      %193 = vmatpush1.bf16.msra.mxu0 %v175
      %194 = vmatprep.subr.bf16.mxu0 0
      %195 = vmatpush1.bf16.msra.mxu0 %v176
      %196 = vmatprep.subr.bf16.mxu0 0
      %197 = vmatpush1.bf16.msra.mxu0 %v177
      %198 = vmatprep.subr.bf16.mxu0 0
      %199 = vmatpush1.bf16.msra.mxu0 %v178
      %200 = vmatprep.subr.bf16.mxu0 0
      %201 = vmatpush1.bf16.msra.mxu0 %v179
      %202 = vmatprep.subr.bf16.mxu0 0
      %203 = vmatpush1.bf16.msra.mxu0 %v180
      %204 = vmatprep.subr.bf16.mxu0 0
      %205 = vmatpush1.bf16.msra.mxu0 %v181
      %206 = vmatprep.subr.bf16.mxu0 0
      %207 = vmatpush1.bf16.msra.mxu0 0
      %208 = vmatprep.subr.bf16.mxu0 0
      %209 = vmatpush1.bf16.msra.mxu0 0
      %210 = vmatprep.subr.bf16.mxu0 0
      %211 = vmatpush1.bf16.msra.mxu0 0
      %212 = vmatprep.subr.bf16.mxu0 0
      %213 = vmatpush1.bf16.msra.mxu0 0
      %214 = vmatprep.subr.bf16.mxu0 0
      %215 = vmatpush1.bf16.msra.mxu0 0
      %216 = vmatprep.subr.bf16.mxu0 0
      %217 = vmatpush1.bf16.msra.mxu0 0
      %218 = vmatprep.subr.bf16.mxu0 0
      %219 = vmatpush1.bf16.msra.mxu0 0
      %220 = vmatprep.subr.bf16.mxu0 0
      %221 = vmatpush1.bf16.msra.mxu0 0
      %222 = vmatprep.mubr.bf16.mxu0 0
      %223 = vmatmul.mubr.bf16.gmra.mrb[0].mxu0 %v140
      %v224 = vpop.f32.mrb[0].mxu0
      %v225 = vadd.f32 0.0, %v224
      %v226 = vpop.f32.mrb[0].mxu0
      %v227 = vpop.f32.mrb[0].mxu0
      %v228 = vpop.f32.mrb[0].mxu0
      %229 = vdwg.mxu0
      %v230 = vadd.f32 %v141, %v225
      %vm231 = vcmask 261120
      %232 = vst.msk [vmem:[#allocation2] sm:$0xff] %vm231, %v230
    $region67: #{tpu_custom_call.1} parent=1 // pred_fallthru
      _
    // Predicated region
    $region68: #{tpu_custom_call.1} parent=1 // pred_check
      %p233 = pneg %p37
    $region69: #{tpu_custom_call.1} parent=1 // pred_check_branch
      %235 = sbr.rel (%p233) target = $region71
    $region70: #{tpu_custom_call.1} parent=1 // pred_region
      %s236 = smul.u32 4, 4
      %s237 = smul.u32 %s236, 1
      %s238 = sshll.u32 %s237, 4
      %239 = dma.done [#allocation5], %s238
      %s240 = scalar_lea.sflag [#allocation5], 1
      %s241 = sshll.u32 %s237, 4
      %242 = dma.done %s240, %s241
      %v243 = vld [vmem:[%s1] sm:$0xff]
      %v244 = vcvt.s32.f32 %v243
      %v245 = vmax.f32 %v244, 1.0
      %v246 = vld [vmem:[#allocation2] sm:$0xff]
      %v247 = vrcp.pop %v245
      %249 = vset.pattern.permute.xlu0 0
      %250 = vperm.xlu0 %249, %v247
      %v251 = vpop.permute.xlu0 %250
      %v253 = vmul.f32 %v246, %v251
      %v254 = vpack.c.bf16 %v253, %v253
      %v255 = vld [vmem:[#allocation3] sm:$0xff]
      %v256 = vld [vmem:[#allocation3 + $0x8] sm:$0xff]
      %v257 = vld [vmem:[%s5] sm:$0x1]
      %v259 = vlaneseq
      %v260 = vshrl.u32 %v259, 7
      %v261 = vsub.s32 0, %v260
      %v262 = vrot.slane %v257, %v261
      %vm264 = vcmask 261120
      %v266 = vsel %vm264, %v254, 0
      %268 = vmatprep.subr.bf16.mxu0 0
      %269 = vmatpush1.bf16.msra.mxu0 %v255
      %270 = vmatprep.subr.bf16.mxu0 0
      %271 = vmatpush1.bf16.msra.mxu0 %v256
      %272 = vmatprep.subr.bf16.mxu0 0
      %273 = vmatpush1.bf16.msra.mxu0 0
      %274 = vmatprep.subr.bf16.mxu0 0
      %275 = vmatpush1.bf16.msra.mxu0 0
      %276 = vmatprep.subr.bf16.mxu0 0
      %277 = vmatpush1.bf16.msra.mxu0 0
      %278 = vmatprep.subr.bf16.mxu0 0
      %279 = vmatpush1.bf16.msra.mxu0 0
      %280 = vmatprep.subr.bf16.mxu0 0
      %281 = vmatpush1.bf16.msra.mxu0 0
      %282 = vmatprep.subr.bf16.mxu0 0
      %283 = vmatpush1.bf16.msra.mxu0 0
      %284 = vmatprep.subr.bf16.mxu0 0
      %285 = vmatpush1.bf16.msra.mxu0 0
      %286 = vmatprep.subr.bf16.mxu0 0
      %287 = vmatpush1.bf16.msra.mxu0 0
      %288 = vmatprep.subr.bf16.mxu0 0
      %289 = vmatpush1.bf16.msra.mxu0 0
      %290 = vmatprep.subr.bf16.mxu0 0
      %291 = vmatpush1.bf16.msra.mxu0 0
      %292 = vmatprep.subr.bf16.mxu0 0
      %293 = vmatpush1.bf16.msra.mxu0 0
      %294 = vmatprep.subr.bf16.mxu0 0
      %295 = vmatpush1.bf16.msra.mxu0 0
      %296 = vmatprep.subr.bf16.mxu0 0
      %297 = vmatpush1.bf16.msra.mxu0 0
      %298 = vmatprep.subr.bf16.mxu0 0
      %299 = vmatpush1.bf16.msra.mxu0 0
      %300 = vmatprep.mubr.bf16.mxu0 0
      %301 = vmatmul.mubr.bf16.gmra.mrb[0].mxu0 %v266
      %v302 = vpop.f32.mrb[0].mxu0
      %v303 = vadd.f32 %v262, %v302
      %v304 = vpop.f32.mrb[0].mxu0
      %v305 = vpop.f32.mrb[0].mxu0
      %v306 = vpop.f32.mrb[0].mxu0
      %307 = vdwg.mxu0
      %v308 = vtanh.pop %v303
      %v309 = vpack.c.bf16 %v308, %v308
      %v310 = vld [vmem:[#allocation4] sm:$0xff]
      %v311 = vld [vmem:[#allocation4 + $0x8] sm:$0xff]
      %v312 = vld [vmem:[%s6] sm:$0x1]
      %v314 = vlaneseq
      %v315 = vshrl.u32 %v314, 7
      %v316 = vsub.s32 0, %v315
      %v317 = vrot.slane %v312, %v316
      %v320 = vsel %vm264, %v309, 0
      %322 = vmatprep.subr.bf16.mxu0 0
      %323 = vmatpush1.bf16.msra.mxu0 %v310
      %324 = vmatprep.subr.bf16.mxu0 0
      %325 = vmatpush1.bf16.msra.mxu0 %v311
      %326 = vmatprep.subr.bf16.mxu0 0
      %327 = vmatpush1.bf16.msra.mxu0 0
      %328 = vmatprep.subr.bf16.mxu0 0
      %329 = vmatpush1.bf16.msra.mxu0 0
      %330 = vmatprep.subr.bf16.mxu0 0
      %331 = vmatpush1.bf16.msra.mxu0 0
      %332 = vmatprep.subr.bf16.mxu0 0
      %333 = vmatpush1.bf16.msra.mxu0 0
      %334 = vmatprep.subr.bf16.mxu0 0
      %335 = vmatpush1.bf16.msra.mxu0 0
      %336 = vmatprep.subr.bf16.mxu0 0
      %337 = vmatpush1.bf16.msra.mxu0 0
      %338 = vmatprep.subr.bf16.mxu0 0
      %339 = vmatpush1.bf16.msra.mxu0 0
      %340 = vmatprep.subr.bf16.mxu0 0
      %341 = vmatpush1.bf16.msra.mxu0 0
      %342 = vmatprep.subr.bf16.mxu0 0
      %343 = vmatpush1.bf16.msra.mxu0 0
      %344 = vmatprep.subr.bf16.mxu0 0
      %345 = vmatpush1.bf16.msra.mxu0 0
      %346 = vmatprep.subr.bf16.mxu0 0
      %347 = vmatpush1.bf16.msra.mxu0 0
      %348 = vmatprep.subr.bf16.mxu0 0
      %349 = vmatpush1.bf16.msra.mxu0 0
      %350 = vmatprep.subr.bf16.mxu0 0
      %351 = vmatpush1.bf16.msra.mxu0 0
      %352 = vmatprep.subr.bf16.mxu0 0
      %353 = vmatpush1.bf16.msra.mxu0 0
      %354 = vmatprep.mubr.bf16.mxu0 0
      %355 = vmatmul.mubr.bf16.gmra.mrb[0].mxu0 %v320
      %v356 = vpop.f32.mrb[0].mxu0
      %v357 = vadd.f32 %v317, %v356
      %v358 = vpop.f32.mrb[0].mxu0
      %v359 = vpop.f32.mrb[0].mxu0
      %v360 = vpop.f32.mrb[0].mxu0
      %361 = vdwg.mxu0
      %362 = vst [vmem:[#allocation11] sm:$0xff] %v357
    $region71: #{tpu_custom_call.1} parent=1 // pred_fallthru
      _
    // Predicated region
    $region72: #{tpu_custom_call.1} parent=1 // pred_check
      _
    $region73: #{tpu_custom_call.1} parent=1 // pred_check_branch
      %364 = sbr.rel (0) target = $region75
    $region74: #{tpu_custom_call.1} parent=1 // pred_region
      %s366 = ssub.s32 128, 128
      %367 = vsyncadd [#allocation10], %s366
      %s369 = sshll.u32 [#allocation11], 4
      %s370 = int_to_ptr.vmem [resolvable:$true] %s369
      %372 = dma.vmem_to_hbm [thread:$0]  %s370, 128, %s7, [#allocation10]
    $region75: #{tpu_custom_call.1} parent=1 // pred_fallthru
      _
    // Predicated region
    $region76: #{tpu_custom_call.1} parent=1 // pred_check
      _
    $region77: #{tpu_custom_call.1} parent=1 // pred_check_branch
      %374 = sbr.rel (0) target = $region79
    $region78: #{tpu_custom_call.1} parent=1 // pred_region
      %375 = dma.done [#allocation10], 128
    $region79: #{tpu_custom_call.1} parent=1 // pred_fallthru
      _
    %376 = vsyncpa [#allocation9], 1
    %377 = vsyncpa [#allocation10], 1
  %378 = vsyncmov [#allocation5]
  %s379 = vpop.sfrf %378
  %p380 = scmp.eq.s32.totalorder %s379, 0
  %p381 = pneg %p380
  %383 = shalt.err (%p381)
  %s384 = scalar_lea.sflag [#allocation5], 1
  %385 = vsyncmov %s384
  %s386 = vpop.sfrf %385
  %p387 = scmp.eq.s32.totalorder %s386, 0
  %p388 = pneg %p387
  %390 = shalt.err (%p388)

</llo_original>
